<compile_context>
chip_gen: v6e
topology: v6e:2x2x1
jax: 0.10.0
libtpu: 0.0.40
codegen_flags: <defaults>
</compile_context>

<pallas_src>
import functools

import jax
import jax.numpy as jnp
from jax.experimental import pallas as pl
from jax.experimental.pallas import tpu as pltpu


def _similarity_kernel(x_ref, y_ref, o_ref, *, scale, c):
    """Computes -dist_poincare(x, y) / temp for a (TN, D) tile of rows."""
    x = x_ref[...].astype(jnp.float32)
    y = y_ref[...].astype(jnp.float32)

    c = jnp.float32(c)

    # Single D-wide pass: three per-row reductions, everything else is (TN, 1).
    x2 = jnp.sum(x * x, axis=-1, keepdims=True)      # ||x||^2
    y2 = jnp.sum(y * y, axis=-1, keepdims=True)      # ||y||^2
    diff = x - y
    d2 = jnp.sum(diff * diff, axis=-1, keepdims=True)  # ||x - y||^2

    # dist = (1/sqrt(c)) * arccosh(1 + 2c*d2 / ((1 - c*x2)*(1 - c*y2)))
    dp = (1.0 - c * x2) * (1.0 - c * y2)                              # (TN, 1)
    inv_dp = pl.reciprocal(jnp.maximum(dp, jnp.float32(1e-15)), approx=False)
    t = jnp.maximum((2.0 * c) * d2 * inv_dp, 0.0)                     # (TN, 1)
    # arccosh(1 + t) = log(1 + t + sqrt(t * (t + 2)))
    acosh = jnp.log(1.0 + t + jnp.sqrt(t * (t + 2.0)))                # (TN, 1)

    # scale = -1 / (sqrt(c) * temp), folded into a single multiply.
    o_ref[...] = (jnp.float32(scale) * acosh).astype(o_ref.dtype)


def _tpu_vmem_capacity_bytes():
    try:
        return int(pltpu.get_tpu_info().vmem_capacity_bytes)
    except Exception:
        return None


def _choose_tiling(n, d, *, max_tile_n=None):
    """Row tile (multiple of 8) + vmem limit, generation-aware and grid >= 2."""
    vmem = _tpu_vmem_capacity_bytes()
    if vmem is not None and vmem >= (100 << 20):
        # v5e / v6e: 128 MiB physical VMEM — big tiles, raised scoped limit.
        budget, limit, max_tile = 40 << 20, 64 << 20, 2048
    else:
        # v7x (64 MiB physical) or unknown: conservative.
        budget, limit, max_tile = 20 << 20, 48 << 20, 1024
    if max_tile_n is not None:
        max_tile = min(max_tile, int(max_tile_n))

    d_pad = max(128, ((d + 127) // 128) * 128)        # lane padding of feature dim
    # 2 inputs x 2 pipeline buffers x tile_n x d_pad x 4 B  <=  budget
    by_vmem = budget // (2 * 2 * d_pad * 4)
    tile = max(8, (min(max_tile, int(by_vmem)) // 8) * 8)

    # Keep the grid >= 2 steps so the "parallel" axis can shard across v7x's two
    # TensorCores; the extra step is negligible on single-TC v5e/v6e.
    half_rows_pad8 = (((n + 1) // 2 + 7) // 8) * 8
    n_pad8 = ((n + 7) // 8) * 8
    tile = max(8, min(tile, half_rows_pad8, n_pad8))
    return tile, limit


def similarity(x, y, *, temp=0.05, c=1.0, max_tile_n=None):
    """Pallas wrapper: x, y are (N, D); returns (N,) = -dist(x, y) / temp."""
    assert x.shape == y.shape and x.ndim == 2
    N, D = x.shape

    tile_n, vmem_limit = _choose_tiling(N, D, max_tile_n=max_tile_n)
    grid = (pl.cdiv(N, tile_n),)   # partial last block: no input padding copies

    scale = -1.0 / (float(c) ** 0.5 * float(temp))
    kernel = functools.partial(_similarity_kernel, scale=scale, c=float(c))

    out = pl.pallas_call(
        kernel,
        out_shape=jax.ShapeDtypeStruct((N, 1), jnp.float32),
        grid_spec=pltpu.PrefetchScalarGridSpec(
            num_scalar_prefetch=0,
            grid=grid,
            in_specs=[
                pl.BlockSpec((tile_n, D), lambda i: (i, 0)),
                pl.BlockSpec((tile_n, D), lambda i: (i, 0)),
            ],
            out_specs=pl.BlockSpec((tile_n, 1), lambda i: (i, 0)),
        ),
        compiler_params=pltpu.CompilerParams(
            dimension_semantics=("parallel",),
            vmem_limit_bytes=vmem_limit,
        ),
        cost_estimate=pl.CostEstimate(
            flops=7 * N * D,
            transcendentals=3 * N,
            bytes_accessed=8 * N * D + 4 * N,
        ),
    )(x, y)
    return out[:, 0]


def _similarity_ref(x, y, temp=0.05, c=1.0):
    """Pure-JAX reference (geoopt PoincareBallExact.dist semantics, Möbius form)."""
    nx = -x
    x2 = jnp.sum(nx * nx, axis=-1, keepdims=True)
    y2 = jnp.sum(y * y, axis=-1, keepdims=True)
    xy = jnp.sum(nx * y, axis=-1, keepdims=True)
    num = (1.0 + 2.0 * c * xy + c * y2) * nx + (1.0 - c * x2) * y
    denom = 1.0 + 2.0 * c * xy + (c * c) * x2 * y2
    ma = num / jnp.maximum(denom, 1e-15)
    norm = jnp.sqrt(jnp.maximum(jnp.sum(ma * ma, axis=-1), 0.0))
    sqrt_c = jnp.sqrt(c)
    u = jnp.clip(sqrt_c * norm, -1.0 + 1e-7, 1.0 - 1e-7)
    dist = (2.0 / sqrt_c) * jnp.arctanh(u)
    return -dist / temp


def _make_ball_points(key, n, d, radius=0.4):
    raw = jax.random.normal(key, (n, d), dtype=jnp.float32)
    return radius * raw / (1.0 + jnp.linalg.norm(raw, axis=-1, keepdims=True))


if __name__ == "__main__":
    temp = 0.05

    # Small shapes consistent with the module (row-wise similarity of embeddings).
    kx, ky = jax.random.split(jax.random.PRNGKey(0))
    N, D = 16, 32
    x = _make_ball_points(kx, N, D)
    y = _make_ball_points(ky, N, D)

    out = similarity(x, y, temp=temp)
    jax.block_until_ready(out)
    ref = _similarity_ref(x, y, temp=temp)
    assert out.shape == (N,)
    assert jnp.allclose(out, ref, atol=1e-4, rtol=1e-4), (out, ref)

    # Multi-tile case with a partial last block (N not a multiple of 8 or the tile).
    kx2, ky2 = jax.random.split(jax.random.PRNGKey(1))
    N2, D2 = 300, 256
    x2 = _make_ball_points(kx2, N2, D2)
    y2 = _make_ball_points(ky2, N2, D2)

    out2 = similarity(x2, y2, temp=temp)
    jax.block_until_ready(out2)
    ref2 = _similarity_ref(x2, y2, temp=temp)
    assert out2.shape == (N2,)
    assert jnp.allclose(out2, ref2, atol=1e-4, rtol=1e-4)

    # Same shapes, forced small tile -> many grid steps, partial last block.
    out3 = similarity(x2, y2, temp=temp, max_tile_n=64)
    jax.block_until_ready(out3)
    assert jnp.allclose(out3, ref2, atol=1e-4, rtol=1e-4)

    print("KERNEL_OK")
</pallas_src>

<mosaic_0001>
module attributes {stable_mosaic.version = 11 : i64} {
  func.func @_similarity_kernel(%arg0: i32, %arg1: memref<8x32xf32, #tpu.memory_space<vmem>>, %arg2: memref<8x32xf32, #tpu.memory_space<vmem>>, %arg3: memref<8x1xf32, #tpu.memory_space<vmem>>) attributes {dimension_semantics = [#tpu.dimension_semantics<parallel>], iteration_bounds = array<i64: 2>, scalar_prefetch = 0 : i64, scratch_operands = 0 : i64, tpu.core_type = #tpu.core_type<tc>, window_params = [{transform_indices = @transform_0, window_bounds = array<i64: 8, 32>}, {transform_indices = @transform_1, window_bounds = array<i64: 8, 32>}, {transform_indices = @transform_2, window_bounds = array<i64: 8, 1>}]} {
    %c0 = arith.constant 0 : index
    %c0_0 = arith.constant 0 : index
    %0 = vector.load %arg1[%c0, %c0_0] : memref<8x32xf32, #tpu.memory_space<vmem>>, vector<8x32xf32>
    %c0_1 = arith.constant 0 : index
    %c0_2 = arith.constant 0 : index
    %1 = vector.load %arg2[%c0_1, %c0_2] : memref<8x32xf32, #tpu.memory_space<vmem>>, vector<8x32xf32>
    %2 = arith.mulf %0, %0 : vector<8x32xf32>
    %cst = arith.constant dense<0.000000e+00> : vector<8xf32>
    %3 = vector.multi_reduction <add>, %2, %cst [1] : vector<8x32xf32> to vector<8xf32>
    %4 = vector.shape_cast %3 : vector<8xf32> to vector<8x1xf32>
    %5 = arith.mulf %1, %1 : vector<8x32xf32>
    %cst_3 = arith.constant dense<0.000000e+00> : vector<8xf32>
    %6 = vector.multi_reduction <add>, %5, %cst_3 [1] : vector<8x32xf32> to vector<8xf32>
    %7 = vector.shape_cast %6 : vector<8xf32> to vector<8x1xf32>
    %8 = arith.subf %0, %1 : vector<8x32xf32>
    %9 = arith.mulf %8, %8 : vector<8x32xf32>
    %cst_4 = arith.constant dense<0.000000e+00> : vector<8xf32>
    %10 = vector.multi_reduction <add>, %9, %cst_4 [1] : vector<8x32xf32> to vector<8xf32>
    %11 = vector.shape_cast %10 : vector<8xf32> to vector<8x1xf32>
    %cst_5 = arith.constant 1.000000e+00 : f32
    %12 = vector.broadcast %cst_5 : f32 to vector<8x1xf32>
    %13 = arith.mulf %12, %4 : vector<8x1xf32>
    %cst_6 = arith.constant 1.000000e+00 : f32
    %14 = vector.broadcast %cst_6 : f32 to vector<8x1xf32>
    %15 = arith.subf %14, %13 : vector<8x1xf32>
    %cst_7 = arith.constant 1.000000e+00 : f32
    %16 = vector.broadcast %cst_7 : f32 to vector<8x1xf32>
    %17 = arith.mulf %16, %7 : vector<8x1xf32>
    %cst_8 = arith.constant 1.000000e+00 : f32
    %18 = vector.broadcast %cst_8 : f32 to vector<8x1xf32>
    %19 = arith.subf %18, %17 : vector<8x1xf32>
    %20 = arith.mulf %15, %19 : vector<8x1xf32>
    %cst_9 = arith.constant 1.000000e-15 : f32
    %21 = vector.broadcast %cst_9 : f32 to vector<8x1xf32>
    %22 = arith.maximumf %20, %21 : vector<8x1xf32>
    %23 = tpu.reciprocal %22 : vector<8x1xf32> -> vector<8x1xf32>
    %cst_10 = arith.constant 2.000000e+00 : f32
    %cst_11 = arith.constant 1.000000e+00 : f32
    %24 = arith.mulf %cst_10, %cst_11 : f32
    %25 = vector.broadcast %24 : f32 to vector<8x1xf32>
    %26 = arith.mulf %25, %11 : vector<8x1xf32>
    %27 = arith.mulf %26, %23 : vector<8x1xf32>
    %cst_12 = arith.constant 0.000000e+00 : f32
    %28 = vector.broadcast %cst_12 : f32 to vector<8x1xf32>
    %29 = arith.maximumf %27, %28 : vector<8x1xf32>
    %cst_13 = arith.constant 1.000000e+00 : f32
    %30 = vector.broadcast %cst_13 : f32 to vector<8x1xf32>
    %31 = arith.addf %30, %29 : vector<8x1xf32>
    %cst_14 = arith.constant 2.000000e+00 : f32
    %32 = vector.broadcast %cst_14 : f32 to vector<8x1xf32>
    %33 = arith.addf %29, %32 : vector<8x1xf32>
    %34 = arith.mulf %29, %33 : vector<8x1xf32>
    %35 = math.sqrt %34 : vector<8x1xf32>
    %36 = arith.addf %31, %35 : vector<8x1xf32>
    %37 = math.log %36 : vector<8x1xf32>
    %cst_15 = arith.constant -2.000000e+01 : f32
    %38 = vector.broadcast %cst_15 : f32 to vector<8x1xf32>
    %39 = arith.mulf %38, %37 : vector<8x1xf32>
    %c0_16 = arith.constant 0 : index
    %c0_17 = arith.constant 0 : index
    %40 = vector.load %arg3[%c0_16, %c0_17] : memref<8x1xf32, #tpu.memory_space<vmem>>, vector<8x1xf32>
    tpu.vector_store %arg3[%c0_16, %c0_17], %39 {strides = array<i32>} : memref<8x1xf32, #tpu.memory_space<vmem>>, vector<8x1xf32>,
    return
  }
  func.func @transform_0(%arg0: i32) -> (i32, i32) {
    %c0_i32 = arith.constant 0 : i32
    %c0_i32_0 = arith.constant 0 : i32
    return %arg0, %c0_i32 : i32, i32
  }
  func.func @transform_1(%arg0: i32) -> (i32, i32) {
    %c0_i32 = arith.constant 0 : i32
    %c0_i32_0 = arith.constant 0 : i32
    return %arg0, %c0_i32 : i32, i32
  }
  func.func @transform_2(%arg0: i32) -> (i32, i32) {
    %c0_i32 = arith.constant 0 : i32
    %c0_i32_0 = arith.constant 0 : i32
    return %arg0, %c0_i32 : i32, i32
  }
}

</mosaic_0001>

<llo_original>
// kernel: tpu_custom_call.1
$region0: #{tpu_custom_call.1}
  #allocation0 [shape = 'u32[]', space=smem, size = 0x4, offset = 0x4, fixed_abs, tag = 'smem constant byte address 0x4 - core index']
  #allocation1 [shape = 'u32[144,128]{1,0:T(1,128)}', space=vmem, size = 0x12000, scoped, tag = 'internal scratch']
  %s0 = inlined_call_operand.hbm [shape: f32[16,32], index: 0, kind: input, shape index: {}]
  %s1 = inlined_call_operand.hbm [shape: f32[16,32], index: 1, kind: input, shape index: {}]
  %s2 = inlined_call_operand.vmem [shape: f32[16,1], index: 2, kind: output, shape index: {}]
  %s3 = sld [smem:[#allocation0]]
  $region49: #{tpu_custom_call.1} parent=0
    _
  %s5 = ssub.s32 1, %s3
  %s6 = scalar_select 0, %s5, %s3
  $region1: #{tpu_custom_call.1} parent=0
    #allocation2 [shape = 'u8[8192]{0}', space=vmem, size = 0x2000, scoped, tag = 'input window, operand 0']
    #allocation3 [shape = 's32[2]{0}', space=sflag, size = 0x8, scoped, tag = 'scoped memory for tpu_custom_call.1']
    #allocation4 [shape = 'u8[8192]{0}', space=vmem, size = 0x2000, scoped, tag = 'input window, operand 1']
    #allocation5 [shape = 's32[2]{0}', space=sflag, size = 0x8, scoped, tag = 'scoped memory for tpu_custom_call.1']
    %7 = vsyncpa [#allocation3], 0
    %s8 = scalar_lea.sflag [#allocation3], 1
    %9 = vsyncpa %s8, 0
    %10 = vsyncpa [#allocation5], 0
    %s11 = scalar_lea.sflag [#allocation5], 1
    %12 = vsyncpa %s11, 0
    loop: start=0, step=1, limit=4
    $region2: #{tpu_custom_call.1} parent=1 // loop_pre_header
      _
    $region3: #{tpu_custom_call.1} parent=1 // loop_header
      %s14 = sphi 0, %s18
      %p15 = scmp.ge.s32.totalorder %s14, 4
      %s24 = sphi 0, %s26
      %s27 = sphi 0, %s24
      %s28 = sphi 0, %s27
      %s44 = sphi 0, %s28
      %s50 = sphi 0, %s52
      %s53 = sphi 0, %s50
      %s54 = sphi 0, %s53
      %s70 = sphi 0, %s54
      %s76 = sphi 0, %s78
      %s79 = sphi 0, %s76
      %s80 = sphi 0, %s79
      %s96 = sphi 0, %s80
    $region4: #{tpu_custom_call.1} parent=1 // loop_header_branch
      %17 = sbr.rel (%p15) target = $region8
    $region5: #{tpu_custom_call.1} parent=1 // loop_body
      %s19 = ssub.s32 %s14, 1
      %s20 = ssub.s32 %s14, 2
      %s21 = sadd.s32 %s14, 1
      %s22 = ssub.s32 %s14, %s21
      %p23 = scmp.eq.s32.totalorder %s22, 0
      %s25 = sadd.s32 %s24, 1
      %s26 = scalar_select %p23, %s24, %s25
      %p29 = pneg %p23
      %p30 = scmp.eq.s32.totalorder %s14, 1
      %p31 = por %p29, %p30
      %p32 = scmp.ne.s32.totalorder %s24, %s27
      %p33 = scmp.eq.s32.totalorder %s14, 0
      %p34 = por %p32, %p33
      %p35 = scmp.ne.s32.totalorder %s24, %s27
      %p36 = scmp.eq.s32.totalorder %s19, 1
      %p37 = por %p35, %p36
      %p38 = scmp.ne.s32.totalorder %s27, %s28
      %p39 = scmp.eq.s32.totalorder %s19, 0
      %p40 = por %p38, %p39
      %p41 = scmp.ne.s32.totalorder %s27, %s28
      %p42 = scmp.eq.s32.totalorder %s20, 1
      %p43 = por %p41, %p42
      %p45 = scmp.ne.s32.totalorder %s28, %s44
      %p46 = scmp.eq.s32.totalorder %s20, 0
      %p47 = por %p45, %p46
      %s48 = ssub.s32 %s14, %s21
      %p49 = scmp.eq.s32.totalorder %s48, 0
      %s51 = sadd.s32 %s50, 1
      %s52 = scalar_select %p49, %s50, %s51
      %p55 = pneg %p49
      %p56 = scmp.eq.s32.totalorder %s14, 1
      %p57 = por %p55, %p56
      %p58 = scmp.ne.s32.totalorder %s50, %s53
      %p59 = scmp.eq.s32.totalorder %s14, 0
      %p60 = por %p58, %p59
      %p61 = scmp.ne.s32.totalorder %s50, %s53
      %p62 = scmp.eq.s32.totalorder %s19, 1
      %p63 = por %p61, %p62
      %p64 = scmp.ne.s32.totalorder %s53, %s54
      %p65 = scmp.eq.s32.totalorder %s19, 0
      %p66 = por %p64, %p65
      %p67 = scmp.ne.s32.totalorder %s53, %s54
      %p68 = scmp.eq.s32.totalorder %s20, 1
      %p69 = por %p67, %p68
      %p71 = scmp.ne.s32.totalorder %s54, %s70
      %p72 = scmp.eq.s32.totalorder %s20, 0
      %p73 = por %p71, %p72
      %s74 = ssub.s32 %s14, %s21
      %p75 = scmp.eq.s32.totalorder %s74, 0
      %s77 = sadd.s32 %s76, 1
      %s78 = scalar_select %p75, %s76, %s77
      %p81 = pneg %p75
      %p82 = scmp.eq.s32.totalorder %s14, 1
      %p83 = por %p81, %p82
      %p84 = scmp.ne.s32.totalorder %s76, %s79
      %p85 = scmp.eq.s32.totalorder %s14, 0
      %p86 = por %p84, %p85
      %p87 = scmp.ne.s32.totalorder %s76, %s79
      %p88 = scmp.eq.s32.totalorder %s19, 1
      %p89 = por %p87, %p88
      %p90 = scmp.ne.s32.totalorder %s79, %s80
      %p91 = scmp.eq.s32.totalorder %s19, 0
      %p92 = por %p90, %p91
      %p93 = scmp.ne.s32.totalorder %s79, %s80
      %p94 = scmp.eq.s32.totalorder %s20, 1
      %p95 = por %p93, %p94
      %p97 = scmp.ne.s32.totalorder %s80, %s96
      %p98 = scmp.eq.s32.totalorder %s20, 0
      %p99 = por %p97, %p98
      %p100 = scmp.le.s32.totalorder 1, %s14
      %p101 = scmp.lt.s32.totalorder %s14, 3
      %p102 = pnand %p100, %p101
      %p103 = pneg %p102
      // Predicated region
      $region9: #{tpu_custom_call.1} parent=5 // pred_check
        _
      $region10: #{tpu_custom_call.1} parent=5 // pred_check_branch
        %105 = sbr.rel (%p102) target = $region12
      $region11: #{tpu_custom_call.1} parent=5 // pred_region
        %s106 = ssub.s32 %s14, 1
      $region12: #{tpu_custom_call.1} parent=5 // pred_fallthru
        _
      %p107 = scmp.lt.s32.totalorder %s14, 2
      // Predicated region
      $region13: #{tpu_custom_call.1} parent=5 // pred_check
        %p108 = pneg %p107
      $region14: #{tpu_custom_call.1} parent=5 // pred_check_branch
        %110 = sbr.rel (%p108) target = $region16
      $region15: #{tpu_custom_call.1} parent=5 // pred_region
        // Predicated region
        $region17: #{tpu_custom_call.1} parent=15 // pred_check
          %p111 = pneg %p34
        $region18: #{tpu_custom_call.1} parent=15 // pred_check_branch
          %113 = sbr.rel (%p111) target = $region20
        $region19: #{tpu_custom_call.1} parent=15 // pred_region
          %s114 = sand.u32 %s24, 1
          %s115 = scalar_lea.sflag [#allocation3], %s114
          %s116 = sand.u32 %s24, 1
          %s117 = smul.addr %s116, 8
          %s118 = scalar_lea.vmem [#allocation2], %s117
          %s120 = ssub.s32 128, 128
          %121 = vsyncadd %s115, %s120
          %s122 = smul.addr %s14, 128
          %s123 = scalar_lea.hbm %s0, %s122
          %s125 = sshll.u32 %s118, 4
          %s126 = int_to_ptr.vmem [resolvable:$true] %s125
          %128 = dma.hbm_to_vmem [thread:$0]  %s123, 128, %s126, %s115
        $region20: #{tpu_custom_call.1} parent=15 // pred_fallthru
          _
        // Predicated region
        $region21: #{tpu_custom_call.1} parent=15 // pred_check
          %p129 = pneg %p60
        $region22: #{tpu_custom_call.1} parent=15 // pred_check_branch
          %131 = sbr.rel (%p129) target = $region24
        $region23: #{tpu_custom_call.1} parent=15 // pred_region
          %s132 = sand.u32 %s50, 1
          %s133 = scalar_lea.sflag [#allocation5], %s132
          %s134 = sand.u32 %s50, 1
          %s135 = smul.addr %s134, 8
          %s136 = scalar_lea.vmem [#allocation4], %s135
          %s138 = ssub.s32 128, 128
          %139 = vsyncadd %s133, %s138
          %s140 = smul.addr %s14, 128
          %s141 = scalar_lea.hbm %s1, %s140
          %s143 = sshll.u32 %s136, 4
          %s144 = int_to_ptr.vmem [resolvable:$true] %s143
          %146 = dma.hbm_to_vmem [thread:$0]  %s141, 128, %s144, %s133
        $region24: #{tpu_custom_call.1} parent=15 // pred_fallthru
          _
      $region16: #{tpu_custom_call.1} parent=5 // pred_fallthru
        _
      %p147 = scmp.le.s32.totalorder 1, %s14
      %p148 = scmp.lt.s32.totalorder %s14, 3
      %p149 = pnand %p147, %p148
      %p150 = pneg %p149
      // Predicated region
      $region25: #{tpu_custom_call.1} parent=5 // pred_check
        _
      $region26: #{tpu_custom_call.1} parent=5 // pred_check_branch
        %152 = sbr.rel (%p149) target = $region28
      $region27: #{tpu_custom_call.1} parent=5 // pred_region
        %s153 = ssub.s32 %s14, 1
        %s154 = sand.u32 %s27, 1
        %s155 = scalar_lea.sflag [#allocation3], %s154
        %s156 = sand.u32 %s27, 1
        %s157 = smul.addr %s156, 8
        %s158 = scalar_lea.vmem [#allocation2], %s157
        // Predicated region
        $region29: #{tpu_custom_call.1} parent=27 // pred_check
          %p159 = pneg %p40
        $region30: #{tpu_custom_call.1} parent=27 // pred_check_branch
          %161 = sbr.rel (%p159) target = $region32
        $region31: #{tpu_custom_call.1} parent=27 // pred_region
          %162 = dma.done %s155, 128
        $region32: #{tpu_custom_call.1} parent=27 // pred_fallthru
          _
        %s163 = sand.u32 %s53, 1
        %s164 = scalar_lea.sflag [#allocation5], %s163
        %s165 = sand.u32 %s53, 1
        %s166 = smul.addr %s165, 8
        %s167 = scalar_lea.vmem [#allocation4], %s166
        // Predicated region
        $region33: #{tpu_custom_call.1} parent=27 // pred_check
          %p168 = pneg %p66
        $region34: #{tpu_custom_call.1} parent=27 // pred_check_branch
          %170 = sbr.rel (%p168) target = $region36
        $region35: #{tpu_custom_call.1} parent=27 // pred_region
          %171 = dma.done %s164, 128
        $region36: #{tpu_custom_call.1} parent=27 // pred_fallthru
          _
        %s172 = sand.u32 %s27, 1
        %s173 = scalar_lea.sflag [#allocation3], %s172
        %s174 = sand.u32 %s27, 1
        %s175 = smul.addr %s174, 8
        %s176 = scalar_lea.vmem [#allocation2], %s175
        %p177 = pneg %p40
        %p178 = pneg %p37
        %s179 = sand.u32 %s53, 1
        %s180 = scalar_lea.sflag [#allocation5], %s179
        %s181 = sand.u32 %s53, 1
        %s182 = smul.addr %s181, 8
        %s183 = scalar_lea.vmem [#allocation4], %s182
        %p184 = pneg %p66
        %p185 = pneg %p63
        %p186 = pneg %p92
        %p187 = pneg %p89
        %p188 = scmp.lt.s32.totalorder %s19, 1
        %s189 = scalar_select %p188, %s19, 1
        %s190 = smul.addr %s189, 8
        %s191 = scalar_lea.vmem %s2, %s190
        %p192 = scmp.lt.s32.totalorder %s19, 1
        %s193 = scalar_select %p192, %s19, 1
        %s194 = smul.addr %s193, 8
        %s195 = scalar_lea.vmem %s2, %s194
        %v196 = vld [vmem:[%s158] sm:$0xff]
        %v197 = vld [vmem:[%s167] sm:$0xff]
        %v198 = vmul.f32 %v196, %v196
        %vm199 = vcmask 261120
        %v200 = vsel %vm199, %v198, 0.0
        %201 = vadd.xlane.f32.xlu0 %v200
        %v202 = vpop.xlane.xlu0 %201
        %v203 = vmul.f32 %v197, %v197
        %v204 = vsel %vm199, %v203, 0.0
        %205 = vadd.xlane.f32.xlu0 %v204
        %v206 = vpop.xlane.xlu0 %205
        %v207 = vsub.f32 %v196, %v197
        %v208 = vmul.f32 %v207, %v207
        %v209 = vsel %vm199, %v208, 0.0
        %210 = vadd.xlane.f32.xlu0 %v209
        %v211 = vpop.xlane.xlu0 %210
        %v212 = vsub.f32 1.0, %v202
        %v213 = vsub.f32 1.0, %v206
        %v214 = vmul.f32 %v212, %v213
        %v215 = vmax.f32 %v214, 1e-15
        %v216 = vrcp.pop %v215
        %v217 = vmul.f32 %v211, 2.0
        %v218 = vmul.f32 %v217, %v216
        %v219 = vmax.f32 %v218, 0.0
        %v220 = vadd.f32 %v219, 1.0
        %v221 = vadd.f32 %v219, 2.0
        %v222 = vmul.f32 %v219, %v221
        %v223 = vrsqrt.pop %v222
        %v224 = vmul.f32 %v222, %v223
        %vm225 = vcmp.eq.f32.partialorder %v222, inf
        %v226 = vsel %vm225, %v222, %v224
        %vm227 = vcmp.eq.f32.partialorder %v222, 0.0
        %v228 = vand.u32 %v222, 2147483648
        %v229 = vsel %vm227, %v228, %v226
        %v230 = vadd.f32 %v220, %v229
        %v231 = vlog2.pop %v230
        %v232 = vmul.f32 %v231, 0.6931472
        %v233 = vmul.f32 %v232, -20.0
        %vm234 = vcmask 7168
        %235 = vst.msk [vmem:[%s195] sm:$0xff] %vm234, %v233
        %p236 = scmp.lt.s32.totalorder %s19, 1
        %s237 = scalar_select %p236, %s19, 1
        %s238 = smul.addr %s237, 8
        %s239 = scalar_lea.vmem %s2, %s238
        // Predicated region
        $region37: #{tpu_custom_call.1} parent=27 // pred_check
          %p240 = pneg %p89
        $region38: #{tpu_custom_call.1} parent=27 // pred_check_branch
          %242 = sbr.rel (%p240) target = $region40
        $region39: #{tpu_custom_call.1} parent=27 // pred_region
          _
        $region40: #{tpu_custom_call.1} parent=27 // pred_fallthru
          _
      $region28: #{tpu_custom_call.1} parent=5 // pred_fallthru
        _
      %p243 = scmp.le.s32.totalorder 2, %s14
      // Predicated region
      $region41: #{tpu_custom_call.1} parent=5 // pred_check
        %p244 = pneg %p243
      $region42: #{tpu_custom_call.1} parent=5 // pred_check_branch
        %246 = sbr.rel (%p244) target = $region44
      $region43: #{tpu_custom_call.1} parent=5 // pred_region
        %s247 = ssub.s32 %s14, 2
        // Predicated region
        $region45: #{tpu_custom_call.1} parent=43 // pred_check
          %p248 = pneg %p95
        $region46: #{tpu_custom_call.1} parent=43 // pred_check_branch
          %250 = sbr.rel (%p248) target = $region48
        $region47: #{tpu_custom_call.1} parent=43 // pred_region
          %p251 = scmp.lt.s32.totalorder %s20, 1
          %s252 = scalar_select %p251, %s20, 1
          %s253 = smul.addr %s252, 8
          %s254 = scalar_lea.vmem %s2, %s253
        $region48: #{tpu_custom_call.1} parent=43 // pred_fallthru
          _
      $region44: #{tpu_custom_call.1} parent=5 // pred_fallthru
        _
    $region6: #{tpu_custom_call.1} parent=1 // loop_footer
      %s18 = sadd.s32 1, %s14
    $region7: #{tpu_custom_call.1} parent=1 // loop_footer_branch
      %13 = sbr.rel target = $region3
    $region8: #{tpu_custom_call.1} parent=1 // loop_exit
      _
    %255 = vsyncpa [#allocation3], 1
    %s256 = scalar_lea.sflag [#allocation3], 1
    %257 = vsyncpa %s256, 1
    %258 = vsyncpa [#allocation5], 1
    %s259 = scalar_lea.sflag [#allocation5], 1
    %260 = vsyncpa %s259, 1

</llo_original>
